<compile_context>
chip_gen: v5e
topology: v5e:2x2
jax: 0.10.0
libtpu: 0.0.40
codegen_flags: <defaults>
</compile_context>

<pallas_src>
import functools

import jax
import jax.numpy as jnp
from jax import lax
from jax.experimental import pallas as pl
from jax.experimental.pallas import tpu as pltpu


# ---------------------------------------------------------------------------
# Fused kernel: one block of Bb batch elements per grid step.
#   - fused QKV projection for all heads and all Bb rows (one big matmul)
#   - per-head, batched causal masked softmax attention
#   - head outputs stored into a VMEM scratch slab (compute dtype)
#   - fused output projection (+ bias), lane-dense (Bb, T, C) store
# ---------------------------------------------------------------------------
def _mha_fused_kernel(x_ref, wqkv_ref, wprojt_ref, bproj_ref, o_ref, heads_ref,
                      *, num_heads, head_size, approx_recip):
    bb, T, C = x_ref.shape
    HD = num_heads * head_size
    cdtype = wqkv_ref.dtype

    x = x_ref[...].reshape(bb * T, C)       # (Bb*T, C)   compute dtype
    w_qkv = wqkv_ref[...]                   # (C, 3*HD)   compute dtype
    w_proj_t = wprojt_ref[...]              # (HD, C)     compute dtype
    b_proj = bproj_ref[...]                 # (1, C)      f32

    # One MXU-dense projection for Q, K, V of ALL heads and ALL Bb batch rows.
    qkv = jnp.dot(x, w_qkv, preferred_element_type=jnp.float32)  # (Bb*T, 3HD) f32

    # Causal mask built ONCE and reused across all heads / batch rows.
    row = lax.broadcasted_iota(jnp.int32, (T, T), 0)
    col = lax.broadcasted_iota(jnp.int32, (T, T), 1)
    causal = (col <= row)[None, :, :]       # (1, T, T)

    scale = head_size ** (-0.5)

    # TODO(synk): with Dh=64, odd-head slices start at a 64-lane offset inside a
    # 128-lane tile; if the bundle dump shows vrot/vsel hot here, pull two-head
    # (128-lane) slices at once or pad Dh to 128 in the weight layout.
    for h in range(num_heads):
        lo = h * head_size
        hi = lo + head_size
        # Scale q in f32 BEFORE the bf16 cast / q·kᵀ matmul (T*Dh mults, not T*T).
        q = (qkv[:, lo:hi] * scale).reshape(bb, T, head_size).astype(cdtype)
        k = qkv[:, HD + lo:HD + hi].reshape(bb, T, head_size).astype(cdtype)
        v = qkv[:, 2 * HD + lo:2 * HD + hi].reshape(bb, T, head_size).astype(cdtype)

        scores = jnp.einsum('bqd,bkd->bqk', q, k,
                            preferred_element_type=jnp.float32)   # (Bb,T,T) f32
        scores = jnp.where(causal, scores, -jnp.inf)

        # numerically-stable softmax, all in f32
        m = jnp.max(scores, axis=-1, keepdims=True)
        e = jnp.exp(scores - m)
        s = jnp.sum(e, axis=-1, keepdims=True)
        wei = (e * pl.reciprocal(s, approx=approx_recip)).astype(cdtype)

        out_h = jnp.einsum('bqk,bkd->bqd', wei, v,
                           preferred_element_type=jnp.float32)    # (Bb,T,Dh) f32
        # Cast to compute dtype immediately; the slab bounds live ranges across
        # the unrolled head loop and halves the stored bytes.
        heads_ref[:, :, lo:hi] = out_h.astype(cdtype)

    # Fused output projection: (Bb*T, HD) @ (HD, C) + b -> lane-dense (Bb,T,C).
    heads = heads_ref[...].reshape(bb * T, HD)
    out = jnp.dot(heads, w_proj_t, preferred_element_type=jnp.float32) + b_proj
    o_ref[...] = out.reshape(bb, T, C).astype(o_ref.dtype)


def _pick_batch_block(B, max_bb=4):
    """Largest divisor of B that is <= max_bb while keeping >=2 grid steps
    (so both v7x TensorCores get work when B >= 2)."""
    if B <= 1:
        return 1
    best = 1
    for bb in range(1, min(max_bb, B // 2) + 1):
        if B % bb == 0:
            best = bb
    return best


def multi_head_attention(x, wq, wk, wv, w_proj, b_proj, *,
                         compute_dtype=jnp.bfloat16,
                         out_dtype=jnp.float32,
                         b_block=None):
    """Fused multi-head causal self-attention.

    x:       (B, T, C)
    wq/wk/wv:(H, C, Dh)  per-head projection weights (already (in, out) layout)
    w_proj:  (C, H*Dh)   PyTorch Linear weight layout (out, in)
    b_proj:  (C,)
    compute_dtype: dtype for MXU operands (bf16 recommended); accumulation and
                   softmax are always f32.
    out_dtype:     output dtype (bf16 halves HBM writeback if tolerated).
    b_block:       batch rows per grid step (default: auto, keeps >=2 steps).
    """
    B, T, C = x.shape
    H, _, Dh = wq.shape
    HD = H * Dh

    bb = _pick_batch_block(B) if b_block is None else b_block
    assert B % bb == 0, "b_block must divide B"

    # ---- host-side weight prep (layout plumbing, not compute hoisting) ----
    # Concatenate per-head Q/K/V weights into one (C, 3*HD) matrix with column
    # blocks [Q heads | K heads | V heads]; column block h equals wq[h] etc.
    w_qkv = jnp.concatenate(
        [wq.transpose(1, 0, 2).reshape(C, HD),
         wk.transpose(1, 0, 2).reshape(C, HD),
         wv.transpose(1, 0, 2).reshape(C, HD)], axis=-1)        # (C, 3*HD)
    w_proj_t = w_proj.T                                         # (HD, C)

    x_c = x.astype(compute_dtype)
    w_qkv_c = w_qkv.astype(compute_dtype)
    w_proj_t_c = w_proj_t.astype(compute_dtype)
    b2 = b_proj.reshape(1, C).astype(jnp.float32)

    # approx reciprocal only on the bf16 path (error << bf16 quantization).
    approx = jnp.dtype(compute_dtype) != jnp.dtype(jnp.float32)
    kernel = functools.partial(_mha_fused_kernel, num_heads=H, head_size=Dh,
                               approx_recip=bool(approx))

    itemsize = jnp.dtype(compute_dtype).itemsize
    out_itemsize = jnp.dtype(out_dtype).itemsize

    # ---- explicit scoped-VMEM limit (per-step working set, with margin) ----
    vmem_needed = (
        2 * bb * T * C * itemsize                       # x block (double buffered)
        + 2 * bb * T * C * out_itemsize                 # out block (double buffered)
        + 2 * (C * 3 * HD + HD * C) * itemsize + 2 * C * 4  # weights (double buffered)
        + bb * T * HD * itemsize                        # heads scratch slab
        + bb * T * 3 * HD * 4                           # qkv f32
        + 3 * bb * T * T * 4                            # scores / exp / wei f32
        + bb * T * C * 4)                               # projection accumulator
    vmem_limit = int(min(max(2 * vmem_needed, 32 * 1024 * 1024),
                         56 * 1024 * 1024))             # stay under v7x physical

    flops = (2 * B * T * C * (3 * HD)          # fused QKV projection
             + 2 * B * H * T * T * Dh * 2      # q·kᵀ and wei·v per head
             + 2 * B * T * HD * C)             # output projection
    transcendentals = B * H * T * T            # softmax exp
    bytes_accessed = (B * T * C * itemsize     # x
                      + C * 3 * HD * itemsize  # W_qkv
                      + HD * C * itemsize      # W_proj^T
                      + C * 4                  # bias
                      + B * T * C * out_itemsize)  # output

    out = pl.pallas_call(
        kernel,
        out_shape=jax.ShapeDtypeStruct((B, T, C), out_dtype),
        grid_spec=pltpu.PrefetchScalarGridSpec(
            num_scalar_prefetch=0,
            grid=(B // bb,),
            in_specs=[
                pl.BlockSpec((bb, T, C), lambda b: (b, 0, 0)),
                # NOTE(synk): the three specs below are grid-invariant; if VMEM
                # headroom is tight on v7x, add pipeline_mode=pl.Buffered(1) to
                # drop their double buffers.
                pl.BlockSpec((C, 3 * HD), lambda b: (0, 0)),
                pl.BlockSpec((HD, C), lambda b: (0, 0)),
                pl.BlockSpec((1, C), lambda b: (0, 0)),
            ],
            out_specs=pl.BlockSpec((bb, T, C), lambda b: (b, 0, 0)),
            scratch_shapes=[pltpu.VMEM((bb, T, HD), compute_dtype)],
        ),
        compiler_params=pltpu.CompilerParams(
            dimension_semantics=("parallel",),
            vmem_limit_bytes=vmem_limit),
        cost_estimate=pl.CostEstimate(
            flops=flops,
            transcendentals=transcendentals,
            bytes_accessed=bytes_accessed),
    )(x_c, w_qkv_c, w_proj_t_c, b2)

    return out


# pure-JAX reference for a correctness sanity check (mirrors the PyTorch module)
def reference(x, wq, wk, wv, w_proj, b_proj):
    B, T, C = x.shape
    H, _, Dh = wq.shape
    mask = jnp.tril(jnp.ones((T, T), dtype=bool))
    outs = []
    for h in range(H):
        q = x @ wq[h]
        k = x @ wk[h]
        v = x @ wv[h]
        wei = (q @ jnp.swapaxes(k, -2, -1)) * (Dh ** -0.5)
        wei = jnp.where(mask, wei, -jnp.inf)
        wei = jax.nn.softmax(wei, axis=-1)
        outs.append(wei @ v)
    cat = jnp.concatenate(outs, axis=-1)
    return cat @ w_proj.T + b_proj


if __name__ == "__main__":
    # small deterministic configuration (scaled-down from the module's
    # n_embedding=512, num_heads=8, block_size=256)
    B, T = 4, 8
    n_embedding = 32
    num_heads = 4
    head_size = n_embedding // num_heads  # 8

    key = jax.random.PRNGKey(0)
    kx, kq, kk, kv, kp, kb = jax.random.split(key, 6)

    x = jax.random.normal(kx, (B, T, n_embedding), dtype=jnp.float32)
    wq = 0.02 * jax.random.normal(kq, (num_heads, n_embedding, head_size), jnp.float32)
    wk = 0.02 * jax.random.normal(kk, (num_heads, n_embedding, head_size), jnp.float32)
    wv = 0.02 * jax.random.normal(kv, (num_heads, n_embedding, head_size), jnp.float32)
    w_proj = 0.02 * jax.random.normal(kp, (n_embedding, num_heads * head_size), jnp.float32)
    b_proj = 0.02 * jax.random.normal(kb, (n_embedding,), jnp.float32)

    ref = reference(x, wq, wk, wv, w_proj, b_proj)

    # exactness check: f32 operand path, f32 output, exact reciprocal
    out_f32 = multi_head_attention(x, wq, wk, wv, w_proj, b_proj,
                                   compute_dtype=jnp.float32,
                                   out_dtype=jnp.float32)
    out_f32 = jax.block_until_ready(out_f32)
    assert out_f32.shape == (B, T, n_embedding)
    assert jnp.allclose(out_f32, ref, atol=1e-5, rtol=1e-5), "f32 mismatch vs reference"

    # production path: bf16 MXU operands + bf16 output, f32 accumulation / softmax
    out_bf16 = multi_head_attention(x, wq, wk, wv, w_proj, b_proj,
                                    compute_dtype=jnp.bfloat16,
                                    out_dtype=jnp.bfloat16)
    out_bf16 = jax.block_until_ready(out_bf16)
    assert out_bf16.shape == (B, T, n_embedding)
    assert jnp.allclose(out_bf16.astype(jnp.float32), ref,
                        atol=5e-3, rtol=5e-2), "bf16 mismatch vs reference"

    print("KERNEL_OK")
</pallas_src>

<mosaic_0001>
module attributes {stable_mosaic.version = 11 : i64} {
  func.func @_mha_fused_kernel(%arg0: i32, %arg1: memref<2x8x32xf32, #tpu.memory_space<vmem>>, %arg2: memref<32x96xf32, #tpu.memory_space<vmem>>, %arg3: memref<32x32xf32, #tpu.memory_space<vmem>>, %arg4: memref<1x32xf32, #tpu.memory_space<vmem>>, %arg5: memref<2x8x32xf32, #tpu.memory_space<vmem>>, %arg6: memref<2x8x32xf32, #tpu.memory_space<vmem>>) attributes {dimension_semantics = [#tpu.dimension_semantics<parallel>], iteration_bounds = array<i64: 2>, scalar_prefetch = 0 : i64, scratch_operands = 1 : i64, tpu.core_type = #tpu.core_type<tc>, window_params = [{transform_indices = @transform_0, window_bounds = array<i64: 2, 8, 32>}, {pipeline_mode = #tpu.pipeline_mode<synchronous>, transform_indices = @transform_1, window_bounds = array<i64: 32, 96>}, {pipeline_mode = #tpu.pipeline_mode<synchronous>, transform_indices = @transform_2, window_bounds = array<i64: 32, 32>}, {pipeline_mode = #tpu.pipeline_mode<synchronous>, transform_indices = @transform_3, window_bounds = array<i64: 1, 32>}, {transform_indices = @transform_4, window_bounds = array<i64: 2, 8, 32>}]} {
    %c0 = arith.constant 0 : index
    %c0_0 = arith.constant 0 : index
    %c0_1 = arith.constant 0 : index
    %0 = vector.load %arg1[%c0, %c0_0, %c0_1] : memref<2x8x32xf32, #tpu.memory_space<vmem>>, vector<2x8x32xf32>
    %1 = vector.shape_cast %0 : vector<2x8x32xf32> to vector<16x32xf32>
    %c0_2 = arith.constant 0 : index
    %c0_3 = arith.constant 0 : index
    %2 = vector.load %arg2[%c0_2, %c0_3] : memref<32x96xf32, #tpu.memory_space<vmem>>, vector<32x96xf32>
    %c0_4 = arith.constant 0 : index
    %c0_5 = arith.constant 0 : index
    %3 = vector.load %arg3[%c0_4, %c0_5] : memref<32x32xf32, #tpu.memory_space<vmem>>, vector<32x32xf32>
    %c0_6 = arith.constant 0 : index
    %c0_7 = arith.constant 0 : index
    %4 = vector.load %arg4[%c0_6, %c0_7] : memref<1x32xf32, #tpu.memory_space<vmem>>, vector<1x32xf32>
    %cst = arith.constant dense<0.000000e+00> : vector<16x96xf32>
    %5 = tpu.matmul %1, %2, %cst {dimension_numbers = #tpu.dot_dimension_numbers<[1], [0], [0], [1], [0, 0, 1, 1], [], []>} : vector<16x32xf32>, vector<32x96xf32>, vector<16x96xf32> -> vector<16x96xf32>
    %6 = tpu.iota {dimensions = array<i32: 0>} : vector<8x8xi32>
    %7 = tpu.iota {dimensions = array<i32: 1>} : vector<8x8xi32>
    %8 = arith.cmpi sle, %7, %6 : vector<8x8xi32>
    %9 = vector.shape_cast %8 : vector<8x8xi1> to vector<1x8x8xi1>
    %10 = vector.extract_strided_slice %5 {offsets = [0, 0], sizes = [16, 8], strides = [1, 1]} : vector<16x96xf32> to vector<16x8xf32>
    %cst_8 = arith.constant 0.353553385 : f32
    %11 = vector.broadcast %cst_8 : f32 to vector<16x8xf32>
    %12 = arith.mulf %10, %11 : vector<16x8xf32>
    %13 = vector.shape_cast %12 : vector<16x8xf32> to vector<2x8x8xf32>
    %14 = vector.extract_strided_slice %5 {offsets = [0, 32], sizes = [16, 8], strides = [1, 1]} : vector<16x96xf32> to vector<16x8xf32>
    %15 = vector.shape_cast %14 : vector<16x8xf32> to vector<2x8x8xf32>
    %16 = vector.extract_strided_slice %5 {offsets = [0, 64], sizes = [16, 8], strides = [1, 1]} : vector<16x96xf32> to vector<16x8xf32>
    %17 = vector.shape_cast %16 : vector<16x8xf32> to vector<2x8x8xf32>
    "tpu.trace_start"() <{level = 10 : i32, message = "bqd,bkd->bqk"}> : () -> ()
    %cst_9 = arith.constant dense<0.000000e+00> : vector<2x8x8xf32>
    %18 = tpu.matmul %13, %15, %cst_9 {dimension_numbers = #tpu.dot_dimension_numbers<[2], [2], [1], [1], [0, 0, 0, 1, 1, 1], [0], [0]>} : vector<2x8x8xf32>, vector<2x8x8xf32>, vector<2x8x8xf32> -> vector<2x8x8xf32>
    %cst_10 = arith.constant 0xFF800000 : f32
    "tpu.trace_stop"() : () -> ()
    %19 = vector.shape_cast %9 : vector<1x8x8xi1> to vector<1x8x8xi1>
    %20 = vector.broadcast %19 : vector<1x8x8xi1> to vector<2x8x8xi1>
    %21 = vector.broadcast %cst_10 : f32 to vector<2x8x8xf32>
    %22 = arith.select %20, %18, %21 : vector<2x8x8xi1>, vector<2x8x8xf32>
    %cst_11 = arith.constant dense<0xFF800000> : vector<2x8xf32>
    %23 = vector.multi_reduction <maximumf>, %22, %cst_11 [2] : vector<2x8x8xf32> to vector<2x8xf32>
    %24 = vector.shape_cast %23 : vector<2x8xf32> to vector<2x8x1xf32>
    %25 = vector.broadcast %24 : vector<2x8x1xf32> to vector<2x8x8xf32>
    %26 = arith.subf %22, %25 : vector<2x8x8xf32>
    %27 = math.exp %26 : vector<2x8x8xf32>
    %cst_12 = arith.constant dense<0.000000e+00> : vector<2x8xf32>
    %28 = vector.multi_reduction <add>, %27, %cst_12 [2] : vector<2x8x8xf32> to vector<2x8xf32>
    %29 = vector.shape_cast %28 : vector<2x8xf32> to vector<2x8x1xf32>
    %30 = tpu.reciprocal %29 : vector<2x8x1xf32> -> vector<2x8x1xf32>
    %31 = vector.broadcast %30 : vector<2x8x1xf32> to vector<2x8x8xf32>
    %32 = arith.mulf %27, %31 : vector<2x8x8xf32>
    "tpu.trace_start"() <{level = 10 : i32, message = "bqk,bkd->bqd"}> : () -> ()
    %cst_13 = arith.constant dense<0.000000e+00> : vector<2x8x8xf32>
    %33 = tpu.matmul %32, %17, %cst_13 {dimension_numbers = #tpu.dot_dimension_numbers<[2], [1], [1], [2], [0, 0, 0, 1, 1, 2], [0], [0]>} : vector<2x8x8xf32>, vector<2x8x8xf32>, vector<2x8x8xf32> -> vector<2x8x8xf32>
    "tpu.trace_stop"() : () -> ()
    %c0_14 = arith.constant 0 : index
    %c0_15 = arith.constant 0 : index
    %c0_16 = arith.constant 0 : index
    %34 = vector.load %arg6[%c0_14, %c0_15, %c0_16] : memref<2x8x32xf32, #tpu.memory_space<vmem>>, vector<2x8x8xf32>
    tpu.vector_store %arg6[%c0_14, %c0_15, %c0_16], %33 {strides = array<i32>} : memref<2x8x32xf32, #tpu.memory_space<vmem>>, vector<2x8x8xf32>,
    %35 = vector.extract_strided_slice %5 {offsets = [0, 8], sizes = [16, 8], strides = [1, 1]} : vector<16x96xf32> to vector<16x8xf32>
    %cst_17 = arith.constant 0.353553385 : f32
    %36 = vector.broadcast %cst_17 : f32 to vector<16x8xf32>
    %37 = arith.mulf %35, %36 : vector<16x8xf32>
    %38 = vector.shape_cast %37 : vector<16x8xf32> to vector<2x8x8xf32>
    %39 = vector.extract_strided_slice %5 {offsets = [0, 40], sizes = [16, 8], strides = [1, 1]} : vector<16x96xf32> to vector<16x8xf32>
    %40 = vector.shape_cast %39 : vector<16x8xf32> to vector<2x8x8xf32>
    %41 = vector.extract_strided_slice %5 {offsets = [0, 72], sizes = [16, 8], strides = [1, 1]} : vector<16x96xf32> to vector<16x8xf32>
    %42 = vector.shape_cast %41 : vector<16x8xf32> to vector<2x8x8xf32>
    "tpu.trace_start"() <{level = 10 : i32, message = "bqd,bkd->bqk"}> : () -> ()
    %cst_18 = arith.constant dense<0.000000e+00> : vector<2x8x8xf32>
    %43 = tpu.matmul %38, %40, %cst_18 {dimension_numbers = #tpu.dot_dimension_numbers<[2], [2], [1], [1], [0, 0, 0, 1, 1, 1], [0], [0]>} : vector<2x8x8xf32>, vector<2x8x8xf32>, vector<2x8x8xf32> -> vector<2x8x8xf32>
    %cst_19 = arith.constant 0xFF800000 : f32
    "tpu.trace_stop"() : () -> ()
    %44 = vector.shape_cast %9 : vector<1x8x8xi1> to vector<1x8x8xi1>
    %45 = vector.broadcast %44 : vector<1x8x8xi1> to vector<2x8x8xi1>
    %46 = vector.broadcast %cst_19 : f32 to vector<2x8x8xf32>
    %47 = arith.select %45, %43, %46 : vector<2x8x8xi1>, vector<2x8x8xf32>
    %cst_20 = arith.constant dense<0xFF800000> : vector<2x8xf32>
    %48 = vector.multi_reduction <maximumf>, %47, %cst_20 [2] : vector<2x8x8xf32> to vector<2x8xf32>
    %49 = vector.shape_cast %48 : vector<2x8xf32> to vector<2x8x1xf32>
    %50 = vector.broadcast %49 : vector<2x8x1xf32> to vector<2x8x8xf32>
    %51 = arith.subf %47, %50 : vector<2x8x8xf32>
    %52 = math.exp %51 : vector<2x8x8xf32>
    %cst_21 = arith.constant dense<0.000000e+00> : vector<2x8xf32>
    %53 = vector.multi_reduction <add>, %52, %cst_21 [2] : vector<2x8x8xf32> to vector<2x8xf32>
    %54 = vector.shape_cast %53 : vector<2x8xf32> to vector<2x8x1xf32>
    %55 = tpu.reciprocal %54 : vector<2x8x1xf32> -> vector<2x8x1xf32>
    %56 = vector.broadcast %55 : vector<2x8x1xf32> to vector<2x8x8xf32>
    %57 = arith.mulf %52, %56 : vector<2x8x8xf32>
    "tpu.trace_start"() <{level = 10 : i32, message = "bqk,bkd->bqd"}> : () -> ()
    %cst_22 = arith.constant dense<0.000000e+00> : vector<2x8x8xf32>
    %58 = tpu.matmul %57, %42, %cst_22 {dimension_numbers = #tpu.dot_dimension_numbers<[2], [1], [1], [2], [0, 0, 0, 1, 1, 2], [0], [0]>} : vector<2x8x8xf32>, vector<2x8x8xf32>, vector<2x8x8xf32> -> vector<2x8x8xf32>
    "tpu.trace_stop"() : () -> ()
    %c0_23 = arith.constant 0 : index
    %c0_24 = arith.constant 0 : index
    %c8 = arith.constant 8 : index
    %59 = vector.load %arg6[%c0_23, %c0_24, %c8] : memref<2x8x32xf32, #tpu.memory_space<vmem>>, vector<2x8x8xf32>
    tpu.vector_store %arg6[%c0_23, %c0_24, %c8], %58 {strides = array<i32>} : memref<2x8x32xf32, #tpu.memory_space<vmem>>, vector<2x8x8xf32>,
    %60 = vector.extract_strided_slice %5 {offsets = [0, 16], sizes = [16, 8], strides = [1, 1]} : vector<16x96xf32> to vector<16x8xf32>
    %cst_25 = arith.constant 0.353553385 : f32
    %61 = vector.broadcast %cst_25 : f32 to vector<16x8xf32>
    %62 = arith.mulf %60, %61 : vector<16x8xf32>
    %63 = vector.shape_cast %62 : vector<16x8xf32> to vector<2x8x8xf32>
    %64 = vector.extract_strided_slice %5 {offsets = [0, 48], sizes = [16, 8], strides = [1, 1]} : vector<16x96xf32> to vector<16x8xf32>
    %65 = vector.shape_cast %64 : vector<16x8xf32> to vector<2x8x8xf32>
    %66 = vector.extract_strided_slice %5 {offsets = [0, 80], sizes = [16, 8], strides = [1, 1]} : vector<16x96xf32> to vector<16x8xf32>
    %67 = vector.shape_cast %66 : vector<16x8xf32> to vector<2x8x8xf32>
    "tpu.trace_start"() <{level = 10 : i32, message = "bqd,bkd->bqk"}> : () -> ()
    %cst_26 = arith.constant dense<0.000000e+00> : vector<2x8x8xf32>
    %68 = tpu.matmul %63, %65, %cst_26 {dimension_numbers = #tpu.dot_dimension_numbers<[2], [2], [1], [1], [0, 0, 0, 1, 1, 1], [0], [0]>} : vector<2x8x8xf32>, vector<2x8x8xf32>, vector<2x8x8xf32> -> vector<2x8x8xf32>
    %cst_27 = arith.constant 0xFF800000 : f32
    "tpu.trace_stop"() : () -> ()
    %69 = vector.shape_cast %9 : vector<1x8x8xi1> to vector<1x8x8xi1>
    %70 = vector.broadcast %69 : vector<1x8x8xi1> to vector<2x8x8xi1>
    %71 = vector.broadcast %cst_27 : f32 to vector<2x8x8xf32>
    %72 = arith.select %70, %68, %71 : vector<2x8x8xi1>, vector<2x8x8xf32>
    %cst_28 = arith.constant dense<0xFF800000> : vector<2x8xf32>
    %73 = vector.multi_reduction <maximumf>, %72, %cst_28 [2] : vector<2x8x8xf32> to vector<2x8xf32>
    %74 = vector.shape_cast %73 : vector<2x8xf32> to vector<2x8x1xf32>
    %75 = vector.broadcast %74 : vector<2x8x1xf32> to vector<2x8x8xf32>
    %76 = arith.subf %72, %75 : vector<2x8x8xf32>
    %77 = math.exp %76 : vector<2x8x8xf32>
    %cst_29 = arith.constant dense<0.000000e+00> : vector<2x8xf32>
    %78 = vector.multi_reduction <add>, %77, %cst_29 [2] : vector<2x8x8xf32> to vector<2x8xf32>
    %79 = vector.shape_cast %78 : vector<2x8xf32> to vector<2x8x1xf32>
    %80 = tpu.reciprocal %79 : vector<2x8x1xf32> -> vector<2x8x1xf32>
    %81 = vector.broadcast %80 : vector<2x8x1xf32> to vector<2x8x8xf32>
    %82 = arith.mulf %77, %81 : vector<2x8x8xf32>
    "tpu.trace_start"() <{level = 10 : i32, message = "bqk,bkd->bqd"}> : () -> ()
    %cst_30 = arith.constant dense<0.000000e+00> : vector<2x8x8xf32>
    %83 = tpu.matmul %82, %67, %cst_30 {dimension_numbers = #tpu.dot_dimension_numbers<[2], [1], [1], [2], [0, 0, 0, 1, 1, 2], [0], [0]>} : vector<2x8x8xf32>, vector<2x8x8xf32>, vector<2x8x8xf32> -> vector<2x8x8xf32>
    "tpu.trace_stop"() : () -> ()
    %c0_31 = arith.constant 0 : index
    %c0_32 = arith.constant 0 : index
    %c16 = arith.constant 16 : index
    %84 = vector.load %arg6[%c0_31, %c0_32, %c16] : memref<2x8x32xf32, #tpu.memory_space<vmem>>, vector<2x8x8xf32>
    tpu.vector_store %arg6[%c0_31, %c0_32, %c16], %83 {strides = array<i32>} : memref<2x8x32xf32, #tpu.memory_space<vmem>>, vector<2x8x8xf32>,
    %85 = vector.extract_strided_slice %5 {offsets = [0, 24], sizes = [16, 8], strides = [1, 1]} : vector<16x96xf32> to vector<16x8xf32>
    %cst_33 = arith.constant 0.353553385 : f32
    %86 = vector.broadcast %cst_33 : f32 to vector<16x8xf32>
    %87 = arith.mulf %85, %86 : vector<16x8xf32>
    %88 = vector.shape_cast %87 : vector<16x8xf32> to vector<2x8x8xf32>
    %89 = vector.extract_strided_slice %5 {offsets = [0, 56], sizes = [16, 8], strides = [1, 1]} : vector<16x96xf32> to vector<16x8xf32>
    %90 = vector.shape_cast %89 : vector<16x8xf32> to vector<2x8x8xf32>
    %91 = vector.extract_strided_slice %5 {offsets = [0, 88], sizes = [16, 8], strides = [1, 1]} : vector<16x96xf32> to vector<16x8xf32>
    %92 = vector.shape_cast %91 : vector<16x8xf32> to vector<2x8x8xf32>
    "tpu.trace_start"() <{level = 10 : i32, message = "bqd,bkd->bqk"}> : () -> ()
    %cst_34 = arith.constant dense<0.000000e+00> : vector<2x8x8xf32>
    %93 = tpu.matmul %88, %90, %cst_34 {dimension_numbers = #tpu.dot_dimension_numbers<[2], [2], [1], [1], [0, 0, 0, 1, 1, 1], [0], [0]>} : vector<2x8x8xf32>, vector<2x8x8xf32>, vector<2x8x8xf32> -> vector<2x8x8xf32>
    %cst_35 = arith.constant 0xFF800000 : f32
    "tpu.trace_stop"() : () -> ()
    %94 = vector.shape_cast %9 : vector<1x8x8xi1> to vector<1x8x8xi1>
    %95 = vector.broadcast %94 : vector<1x8x8xi1> to vector<2x8x8xi1>
    %96 = vector.broadcast %cst_35 : f32 to vector<2x8x8xf32>
    %97 = arith.select %95, %93, %96 : vector<2x8x8xi1>, vector<2x8x8xf32>
    %cst_36 = arith.constant dense<0xFF800000> : vector<2x8xf32>
    %98 = vector.multi_reduction <maximumf>, %97, %cst_36 [2] : vector<2x8x8xf32> to vector<2x8xf32>
    %99 = vector.shape_cast %98 : vector<2x8xf32> to vector<2x8x1xf32>
    %100 = vector.broadcast %99 : vector<2x8x1xf32> to vector<2x8x8xf32>
    %101 = arith.subf %97, %100 : vector<2x8x8xf32>
    %102 = math.exp %101 : vector<2x8x8xf32>
    %cst_37 = arith.constant dense<0.000000e+00> : vector<2x8xf32>
    %103 = vector.multi_reduction <add>, %102, %cst_37 [2] : vector<2x8x8xf32> to vector<2x8xf32>
    %104 = vector.shape_cast %103 : vector<2x8xf32> to vector<2x8x1xf32>
    %105 = tpu.reciprocal %104 : vector<2x8x1xf32> -> vector<2x8x1xf32>
    %106 = vector.broadcast %105 : vector<2x8x1xf32> to vector<2x8x8xf32>
    %107 = arith.mulf %102, %106 : vector<2x8x8xf32>
    "tpu.trace_start"() <{level = 10 : i32, message = "bqk,bkd->bqd"}> : () -> ()
    %cst_38 = arith.constant dense<0.000000e+00> : vector<2x8x8xf32>
    %108 = tpu.matmul %107, %92, %cst_38 {dimension_numbers = #tpu.dot_dimension_numbers<[2], [1], [1], [2], [0, 0, 0, 1, 1, 2], [0], [0]>} : vector<2x8x8xf32>, vector<2x8x8xf32>, vector<2x8x8xf32> -> vector<2x8x8xf32>
    "tpu.trace_stop"() : () -> ()
    %c0_39 = arith.constant 0 : index
    %c0_40 = arith.constant 0 : index
    %c24 = arith.constant 24 : index
    %109 = vector.load %arg6[%c0_39, %c0_40, %c24] : memref<2x8x32xf32, #tpu.memory_space<vmem>>, vector<2x8x8xf32>
    tpu.vector_store %arg6[%c0_39, %c0_40, %c24], %108 {strides = array<i32>} : memref<2x8x32xf32, #tpu.memory_space<vmem>>, vector<2x8x8xf32>,
    %c0_41 = arith.constant 0 : index
    %c0_42 = arith.constant 0 : index
    %c0_43 = arith.constant 0 : index
    %110 = vector.load %arg6[%c0_41, %c0_42, %c0_43] : memref<2x8x32xf32, #tpu.memory_space<vmem>>, vector<2x8x32xf32>
    %111 = vector.shape_cast %110 : vector<2x8x32xf32> to vector<16x32xf32>
    %cst_44 = arith.constant dense<0.000000e+00> : vector<16x32xf32>
    %112 = tpu.matmul %111, %3, %cst_44 {dimension_numbers = #tpu.dot_dimension_numbers<[1], [0], [0], [1], [0, 0, 1, 1], [], []>} : vector<16x32xf32>, vector<32x32xf32>, vector<16x32xf32> -> vector<16x32xf32>
    %113 = vector.broadcast %4 : vector<1x32xf32> to vector<16x32xf32>
    %114 = arith.addf %112, %113 : vector<16x32xf32>
    %115 = vector.shape_cast %114 : vector<16x32xf32> to vector<2x8x32xf32>
    %c0_45 = arith.constant 0 : index
    %c0_46 = arith.constant 0 : index
    %c0_47 = arith.constant 0 : index
    %116 = vector.load %arg5[%c0_45, %c0_46, %c0_47] : memref<2x8x32xf32, #tpu.memory_space<vmem>>, vector<2x8x32xf32>
    tpu.vector_store %arg5[%c0_45, %c0_46, %c0_47], %115 {strides = array<i32>} : memref<2x8x32xf32, #tpu.memory_space<vmem>>, vector<2x8x32xf32>,
    return
  }
  func.func @transform_0(%arg0: i32) -> (i32, i32, i32) {
    %c0_i32 = arith.constant 0 : i32
    %c0_i32_0 = arith.constant 0 : i32
    %c0_i32_1 = arith.constant 0 : i32
    return %arg0, %c0_i32, %c0_i32_0 : i32, i32, i32
  }
  func.func @transform_1(%arg0: i32) -> (i32, i32) {
    %c0_i32 = arith.constant 0 : i32
    %c0_i32_0 = arith.constant 0 : i32
    %c0_i32_1 = arith.constant 0 : i32
    return %c0_i32, %c0_i32_0 : i32, i32
  }
  func.func @transform_2(%arg0: i32) -> (i32, i32) {
    %c0_i32 = arith.constant 0 : i32
    %c0_i32_0 = arith.constant 0 : i32
    %c0_i32_1 = arith.constant 0 : i32
    return %c0_i32, %c0_i32_0 : i32, i32
  }
  func.func @transform_3(%arg0: i32) -> (i32, i32) {
    %c0_i32 = arith.constant 0 : i32
    %c0_i32_0 = arith.constant 0 : i32
    %c0_i32_1 = arith.constant 0 : i32
    return %c0_i32, %c0_i32_0 : i32, i32
  }
  func.func @transform_4(%arg0: i32) -> (i32, i32, i32) {
    %c0_i32 = arith.constant 0 : i32
    %c0_i32_0 = arith.constant 0 : i32
    %c0_i32_1 = arith.constant 0 : i32
    return %arg0, %c0_i32, %c0_i32_0 : i32, i32, i32
  }
}

</mosaic_0001>

<llo_original>
// kernel: tpu_custom_call.1
$region0: #{tpu_custom_call.1}
  #allocation0 [shape = 'u32[]', space=smem, size = 0x4, offset = 0x4, fixed_abs, tag = 'smem constant byte address 0x4 - core index']
  #allocation1 [shape = 'u32[72,128]{1,0:T(1,128)}', space=vmem, size = 0x9000, scoped, tag = 'internal scratch']
  #allocation2 [shape = 'f32[2,8,32]{2,1,0:T(8,128)}', space=vmem, size = 0x2000, scoped, tag = 'scratch operand']
  %s0 = inlined_call_operand.hbm [shape: f32[4,8,32], index: 0, kind: input, shape index: {}]
  %s1 = inlined_call_operand.hbm [shape: f32[32,96], index: 1, kind: input, shape index: {}]
  %s2 = inlined_call_operand.hbm [shape: f32[32,32], index: 2, kind: input, shape index: {}]
  %s3 = inlined_call_operand.vmem [shape: f32[1,32], index: 3, kind: input, shape index: {}]
  %s4 = inlined_call_operand.hbm [shape: f32[4,8,32], index: 4, kind: output, shape index: {}]
  %s5 = sld [smem:[#allocation0]]
  $region61: #{tpu_custom_call.1} parent=0
    _
  %s7 = ssub.s32 1, %s5
  %s8 = scalar_select 0, %s7, %s5
  $region1: #{tpu_custom_call.1} parent=0
    #allocation3 [shape = 'u8[16384]{0}', space=vmem, size = 0x4000, scoped, tag = 'input window, operand 0']
    #allocation4 [shape = 's32[2]{0}', space=sflag, size = 0x8, scoped, tag = 'scoped memory for tpu_custom_call.1']
    #allocation5 [shape = 's32[2]{0}', space=sflag, size = 0x8, scoped, tag = 'scoped memory for tpu_custom_call.1']
    #allocation6 [shape = 'u8[16384]{0}', space=vmem, size = 0x4000, scoped, tag = 'input window, operand 1, single buffered']
    #allocation7 [shape = 's32[1]{0}', space=sflag, size = 0x4, scoped, tag = 'scoped memory for tpu_custom_call.1']
    #allocation8 [shape = 'u8[16384]{0}', space=vmem, size = 0x4000, scoped, tag = 'input window, operand 2, single buffered']
    #allocation9 [shape = 'u8[16384]{0}', space=vmem, size = 0x4000, scoped, tag = 'output window, operand 0']
    %9 = vsyncpa [#allocation4], 0
    %s10 = scalar_lea.sflag [#allocation4], 1
    %11 = vsyncpa %s10, 0
    %12 = vsyncpa [#allocation7], 0
    %13 = vsyncpa [#allocation5], 0
    %s14 = scalar_lea.sflag [#allocation5], 1
    %15 = vsyncpa %s14, 0
    loop: start=0, step=1, limit=4
    $region2: #{tpu_custom_call.1} parent=1 // loop_pre_header
      _
    $region3: #{tpu_custom_call.1} parent=1 // loop_header
      %s17 = sphi 0, %s21
      %p18 = scmp.ge.s32.totalorder %s17, 4
      %s27 = sphi 0, %s29
      %s30 = sphi 0, %s27
      %s31 = sphi 0, %s30
      %s47 = sphi 0, %s31
      %s51 = sphi 0, %s51
      %s53 = sphi 0, %s51
      %s54 = sphi 0, %s53
      %s68 = sphi 0, %s54
      %s72 = sphi 0, %s72
      %s74 = sphi 0, %s72
      %s75 = sphi 0, %s74
      %s89 = sphi 0, %s75
      %s93 = sphi 0, %s93
      %s95 = sphi 0, %s93
      %s96 = sphi 0, %s95
      %s110 = sphi 0, %s96
      %s116 = sphi 0, %s118
      %s119 = sphi 0, %s116
      %s120 = sphi 0, %s119
      %s136 = sphi 0, %s120
    $region4: #{tpu_custom_call.1} parent=1 // loop_header_branch
      %20 = sbr.rel (%p18) target = $region8
    $region5: #{tpu_custom_call.1} parent=1 // loop_body
      %s22 = ssub.s32 %s17, 1
      %s23 = ssub.s32 %s17, 2
      %s24 = sadd.s32 %s17, 1
      %s25 = ssub.s32 %s17, %s24
      %p26 = scmp.eq.s32.totalorder %s25, 0
      %s28 = sadd.s32 %s27, 1
      %s29 = scalar_select %p26, %s27, %s28
      %p32 = pneg %p26
      %p33 = scmp.eq.s32.totalorder %s17, 1
      %p34 = por %p32, %p33
      %p35 = scmp.ne.s32.totalorder %s27, %s30
      %p36 = scmp.eq.s32.totalorder %s17, 0
      %p37 = por %p35, %p36
      %p38 = scmp.ne.s32.totalorder %s27, %s30
      %p39 = scmp.eq.s32.totalorder %s22, 1
      %p40 = por %p38, %p39
      %p41 = scmp.ne.s32.totalorder %s30, %s31
      %p42 = scmp.eq.s32.totalorder %s22, 0
      %p43 = por %p41, %p42
      %p44 = scmp.ne.s32.totalorder %s30, %s31
      %p45 = scmp.eq.s32.totalorder %s23, 1
      %p46 = por %p44, %p45
      %p48 = scmp.ne.s32.totalorder %s31, %s47
      %p49 = scmp.eq.s32.totalorder %s23, 0
      %p50 = por %p48, %p49
      %s52 = sadd.s32 %s51, 1
      %p55 = scmp.eq.s32.totalorder %s17, 1
      %p56 = scmp.ne.s32.totalorder %s51, %s53
      %p57 = scmp.eq.s32.totalorder %s17, 0
      %p58 = por %p56, %p57
      %p59 = scmp.ne.s32.totalorder %s51, %s53
      %p60 = scmp.eq.s32.totalorder %s22, 1
      %p61 = por %p59, %p60
      %p62 = scmp.ne.s32.totalorder %s53, %s54
      %p63 = scmp.eq.s32.totalorder %s22, 0
      %p64 = por %p62, %p63
      %p65 = scmp.ne.s32.totalorder %s53, %s54
      %p66 = scmp.eq.s32.totalorder %s23, 1
      %p67 = por %p65, %p66
      %p69 = scmp.ne.s32.totalorder %s54, %s68
      %p70 = scmp.eq.s32.totalorder %s23, 0
      %p71 = por %p69, %p70
      %s73 = sadd.s32 %s72, 1
      %p76 = scmp.eq.s32.totalorder %s17, 1
      %p77 = scmp.ne.s32.totalorder %s72, %s74
      %p78 = scmp.eq.s32.totalorder %s17, 0
      %p79 = por %p77, %p78
      %p80 = scmp.ne.s32.totalorder %s72, %s74
      %p81 = scmp.eq.s32.totalorder %s22, 1
      %p82 = por %p80, %p81
      %p83 = scmp.ne.s32.totalorder %s74, %s75
      %p84 = scmp.eq.s32.totalorder %s22, 0
      %p85 = por %p83, %p84
      %p86 = scmp.ne.s32.totalorder %s74, %s75
      %p87 = scmp.eq.s32.totalorder %s23, 1
      %p88 = por %p86, %p87
      %p90 = scmp.ne.s32.totalorder %s75, %s89
      %p91 = scmp.eq.s32.totalorder %s23, 0
      %p92 = por %p90, %p91
      %s94 = sadd.s32 %s93, 1
      %p97 = scmp.eq.s32.totalorder %s17, 1
      %p98 = scmp.ne.s32.totalorder %s93, %s95
      %p99 = scmp.eq.s32.totalorder %s17, 0
      %p100 = por %p98, %p99
      %p101 = scmp.ne.s32.totalorder %s93, %s95
      %p102 = scmp.eq.s32.totalorder %s22, 1
      %p103 = por %p101, %p102
      %p104 = scmp.ne.s32.totalorder %s95, %s96
      %p105 = scmp.eq.s32.totalorder %s22, 0
      %p106 = por %p104, %p105
      %p107 = scmp.ne.s32.totalorder %s95, %s96
      %p108 = scmp.eq.s32.totalorder %s23, 1
      %p109 = por %p107, %p108
      %p111 = scmp.ne.s32.totalorder %s96, %s110
      %p112 = scmp.eq.s32.totalorder %s23, 0
      %p113 = por %p111, %p112
      %s114 = ssub.s32 %s17, %s24
      %p115 = scmp.eq.s32.totalorder %s114, 0
      %s117 = sadd.s32 %s116, 1
      %s118 = scalar_select %p115, %s116, %s117
      %p121 = pneg %p115
      %p122 = scmp.eq.s32.totalorder %s17, 1
      %p123 = por %p121, %p122
      %p124 = scmp.ne.s32.totalorder %s116, %s119
      %p125 = scmp.eq.s32.totalorder %s17, 0
      %p126 = por %p124, %p125
      %p127 = scmp.ne.s32.totalorder %s116, %s119
      %p128 = scmp.eq.s32.totalorder %s22, 1
      %p129 = por %p127, %p128
      %p130 = scmp.ne.s32.totalorder %s119, %s120
      %p131 = scmp.eq.s32.totalorder %s22, 0
      %p132 = por %p130, %p131
      %p133 = scmp.ne.s32.totalorder %s119, %s120
      %p134 = scmp.eq.s32.totalorder %s23, 1
      %p135 = por %p133, %p134
      %p137 = scmp.ne.s32.totalorder %s120, %s136
      %p138 = scmp.eq.s32.totalorder %s23, 0
      %p139 = por %p137, %p138
      %p140 = scmp.le.s32.totalorder 1, %s17
      %p141 = scmp.lt.s32.totalorder %s17, 3
      %p142 = pnand %p140, %p141
      %p143 = pneg %p142
      // Predicated region
      $region9: #{tpu_custom_call.1} parent=5 // pred_check
        _
      $region10: #{tpu_custom_call.1} parent=5 // pred_check_branch
        %145 = sbr.rel (%p142) target = $region12
      $region11: #{tpu_custom_call.1} parent=5 // pred_region
        %s146 = ssub.s32 %s17, 1
        // Predicated region
        $region13: #{tpu_custom_call.1} parent=11 // pred_check
          %p147 = pneg %p64
        $region14: #{tpu_custom_call.1} parent=11 // pred_check_branch
          %149 = sbr.rel (%p147) target = $region16
        $region15: #{tpu_custom_call.1} parent=11 // pred_region
          %151 = vsyncadd [#allocation7], 0
          %s152 = sshll.u32 %s1, 4
          %s153 = int_to_ptr.hbm [resolvable:$true] %s152
          %s154 = sshll.u32 [#allocation6], 4
          %s155 = int_to_ptr.vmem [resolvable:$true] %s154
          %160 = dma.hbm_to_vmem [thread:$0]  %s153, 512, %s155, [#allocation7], 128, 128, 8
        $region16: #{tpu_custom_call.1} parent=11 // pred_fallthru
          _
        // Predicated region
        $region17: #{tpu_custom_call.1} parent=11 // pred_check
          %p161 = pneg %p85
        $region18: #{tpu_custom_call.1} parent=11 // pred_check_branch
          %163 = sbr.rel (%p161) target = $region20
        $region19: #{tpu_custom_call.1} parent=11 // pred_region
          %165 = vsyncadd [#allocation7], 0
          %s166 = sshll.u32 %s2, 4
          %s167 = int_to_ptr.hbm [resolvable:$true] %s166
          %s168 = sshll.u32 [#allocation8], 4
          %s169 = int_to_ptr.vmem [resolvable:$true] %s168
          %174 = dma.hbm_to_vmem [thread:$0]  %s167, 512, %s169, [#allocation7], 128, 128, 8
        $region20: #{tpu_custom_call.1} parent=11 // pred_fallthru
          _
        // Predicated region
        $region21: #{tpu_custom_call.1} parent=11 // pred_check
          %p175 = pneg %p106
        $region22: #{tpu_custom_call.1} parent=11 // pred_check_branch
          %177 = sbr.rel (%p175) target = $region24
        $region23: #{tpu_custom_call.1} parent=11 // pred_region
          _
        $region24: #{tpu_custom_call.1} parent=11 // pred_fallthru
          _
      $region12: #{tpu_custom_call.1} parent=5 // pred_fallthru
        _
      %p178 = scmp.lt.s32.totalorder %s17, 2
      // Predicated region
      $region25: #{tpu_custom_call.1} parent=5 // pred_check
        %p179 = pneg %p178
      $region26: #{tpu_custom_call.1} parent=5 // pred_check_branch
        %181 = sbr.rel (%p179) target = $region28
      $region27: #{tpu_custom_call.1} parent=5 // pred_region
        // Predicated region
        $region29: #{tpu_custom_call.1} parent=27 // pred_check
          %p182 = pneg %p37
        $region30: #{tpu_custom_call.1} parent=27 // pred_check_branch
          %184 = sbr.rel (%p182) target = $region32
        $region31: #{tpu_custom_call.1} parent=27 // pred_region
          %s185 = sand.u32 %s27, 1
          %s186 = scalar_lea.sflag [#allocation4], %s185
          %s187 = sand.u32 %s27, 1
          %s188 = smul.addr %s187, 16
          %s189 = scalar_lea.vmem [#allocation3], %s188
          %s190 = smul.u32 2, %s17
          %192 = vsyncadd %s186, 0
          %s193 = smul.addr %s190, 8
          %s194 = scalar_lea.hbm %s0, %s193
          %s195 = sshll.u32 %s194, 4
          %s196 = int_to_ptr.hbm [resolvable:$true] %s195
          %s197 = sshll.u32 %s189, 4
          %s198 = int_to_ptr.vmem [resolvable:$true] %s197
          %203 = dma.hbm_to_vmem [thread:$0]  %s196, 256, %s198, %s186, 128, 128, 8
        $region32: #{tpu_custom_call.1} parent=27 // pred_fallthru
          _
      $region28: #{tpu_custom_call.1} parent=5 // pred_fallthru
        _
      %p204 = scmp.le.s32.totalorder 1, %s17
      %p205 = scmp.lt.s32.totalorder %s17, 3
      %p206 = pnand %p204, %p205
      %p207 = pneg %p206
      // Predicated region
      $region33: #{tpu_custom_call.1} parent=5 // pred_check
        _
      $region34: #{tpu_custom_call.1} parent=5 // pred_check_branch
        %209 = sbr.rel (%p206) target = $region36
      $region35: #{tpu_custom_call.1} parent=5 // pred_region
        %s210 = ssub.s32 %s17, 1
        %s211 = sand.u32 %s30, 1
        %s212 = scalar_lea.sflag [#allocation4], %s211
        %s213 = sand.u32 %s30, 1
        %s214 = smul.addr %s213, 16
        %s215 = scalar_lea.vmem [#allocation3], %s214
        // Predicated region
        $region37: #{tpu_custom_call.1} parent=35 // pred_check
          %p216 = pneg %p43
        $region38: #{tpu_custom_call.1} parent=35 // pred_check_branch
          %218 = sbr.rel (%p216) target = $region40
        $region39: #{tpu_custom_call.1} parent=35 // pred_region
          %220 = dma.done %s212, 256
        $region40: #{tpu_custom_call.1} parent=35 // pred_fallthru
          _
        // Predicated region
        $region41: #{tpu_custom_call.1} parent=35 // pred_check
          %p221 = pneg %p64
        $region42: #{tpu_custom_call.1} parent=35 // pred_check_branch
          %223 = sbr.rel (%p221) target = $region44
        $region43: #{tpu_custom_call.1} parent=35 // pred_region
          %225 = dma.done [#allocation7], 512
        $region44: #{tpu_custom_call.1} parent=35 // pred_fallthru
          _
        // Predicated region
        $region45: #{tpu_custom_call.1} parent=35 // pred_check
          %p226 = pneg %p85
        $region46: #{tpu_custom_call.1} parent=35 // pred_check_branch
          %228 = sbr.rel (%p226) target = $region48
        $region47: #{tpu_custom_call.1} parent=35 // pred_region
          %230 = dma.done [#allocation7], 512
        $region48: #{tpu_custom_call.1} parent=35 // pred_fallthru
          _
        %s231 = sand.u32 %s30, 1
        %s232 = scalar_lea.sflag [#allocation4], %s231
        %s233 = sand.u32 %s30, 1
        %s234 = smul.addr %s233, 16
        %s235 = scalar_lea.vmem [#allocation3], %s234
        %p236 = pneg %p43
        %p237 = pneg %p40
        %p238 = pneg %p64
        %p239 = pneg %p61
        %p240 = pneg %p85
        %p241 = pneg %p82
        %p242 = pneg %p106
        %p243 = pneg %p103
        %p244 = pneg %p132
        %p245 = pneg %p129
        %s246 = sand.u32 %s119, 1
        %s247 = scalar_lea.sflag [#allocation5], %s246
        %s248 = sand.u32 %s119, 1
        %s249 = smul.addr %s248, 16
        %s250 = scalar_lea.vmem [#allocation9], %s249
        %s251 = smul.u32 2, %s22
        %s252 = smul.u32 2, %s22
        %v253 = vld [vmem:[%s215] sm:$0xff]
        %v254 = vld [vmem:[%s215 + $0x8] sm:$0xff]
        %v255 = vld [vmem:[#allocation6] sm:$0xff]
        %v256 = vld [vmem:[#allocation6 + $0x8] sm:$0xff]
        %v257 = vld [vmem:[#allocation6 + $0x10] sm:$0xff]
        %v258 = vld [vmem:[#allocation6 + $0x18] sm:$0xff]
        %v259 = vld [vmem:[#allocation8] sm:$0xff]
        %v260 = vld [vmem:[#allocation8 + $0x8] sm:$0xff]
        %v261 = vld [vmem:[#allocation8 + $0x10] sm:$0xff]
        %v262 = vld [vmem:[#allocation8 + $0x18] sm:$0xff]
        %v263 = vld [vmem:[%s3] sm:$0x1]
        %vm264 = vcmask 261120
        %v266 = vsel %vm264, %v253, 0
        %v269 = vsel %vm264, %v254, 0
        %271 = vmatpush.msra.mxu0 0.0
        %272 = vmatpush.msra.mxu0 0.0
        %273 = vmatpush.msra.mxu0 0.0
        %274 = vmatpush.msra.mxu0 0.0
        %275 = vmatpush.msra.mxu0 0.0
        %276 = vmatpush.msra.mxu0 0.0
        %277 = vmatpush.msra.mxu0 0.0
        %278 = vmatpush.msra.mxu0 0.0
        %279 = vmatpush.msra.mxu0 0.0
        %280 = vmatpush.msra.mxu0 0.0
        %281 = vmatpush.msra.mxu0 0.0
        %282 = vmatpush.msra.mxu0 0.0
        %283 = vmatpush.msra.mxu0 %v258
        %284 = vmatpush.msra.mxu0 %v257
        %285 = vmatpush.msra.mxu0 %v256
        %286 = vmatpush.msra.mxu0 %v255
        %287 = vmatmul.f32.gmra.mxu0 %v266
        %v288 = vpop.f32.mrf.mxu0
        %v289 = vadd.f32 0.0, %v288
        %290 = vmatmul.f32.gmra.mxu0 %v269
        %v291 = vpop.f32.mrf.mxu0
        %v292 = vadd.f32 0.0, %v291
        %293 = vdwg.mxu0
        %v294 = vlaneseq
        %v295 = vshrl.u32 %v294, 7
        %v296 = vlaneseq
        %v297 = vand.u32 %v296, 127
        %vm298 = vcmp.le.s32.totalorder %v297, %v295
        %v299 = vmul.f32 %v289, 0.35355338
        %v300 = vmul.f32 %v292, 0.35355338
        %302 = vrot.lane.b32.xlu0 %v289, 96
        %v303 = vpop.permute.xlu0 %302
        %vm304 = vcmask 64512
        %v306 = vsel %vm304, %v299, 0
        %v308 = vsel %vm304, %v303, 0
        %310 = vmatpush.xpose.msra.mxu0 0.0
        %311 = vmatpush.xpose.msra.mxu0 0.0
        %312 = vmatpush.xpose.msra.mxu0 0.0
        %313 = vmatpush.xpose.msra.mxu0 0.0
        %314 = vmatpush.xpose.msra.mxu0 0.0
        %315 = vmatpush.xpose.msra.mxu0 0.0
        %316 = vmatpush.xpose.msra.mxu0 0.0
        %317 = vmatpush.xpose.msra.mxu0 0.0
        %318 = vmatpush.xpose.msra.mxu0 0.0
        %319 = vmatpush.xpose.msra.mxu0 0.0
        %320 = vmatpush.xpose.msra.mxu0 0.0
        %321 = vmatpush.xpose.msra.mxu0 0.0
        %322 = vmatpush.xpose.msra.mxu0 0.0
        %323 = vmatpush.xpose.msra.mxu0 0.0
        %324 = vmatpush.xpose.msra.mxu0 0.0
        %325 = vmatpush.xpose.msra.mxu0 %v308
        %326 = vmatmul.f32.gmra.mxu0 %v306
        %v327 = vpop.f32.mrf.mxu0
        %v328 = vadd.f32 0.0, %v327
        %329 = vdwg.mxu0
        %331 = vrot.lane.b32.xlu0 %v292, 96
        %v332 = vpop.permute.xlu0 %331
        %v334 = vsel %vm304, %v300, 0
        %v336 = vsel %vm304, %v332, 0
        %338 = vmatpush.xpose.msra.mxu0 0.0
        %339 = vmatpush.xpose.msra.mxu0 0.0
        %340 = vmatpush.xpose.msra.mxu0 0.0
        %341 = vmatpush.xpose.msra.mxu0 0.0
        %342 = vmatpush.xpose.msra.mxu0 0.0
        %343 = vmatpush.xpose.msra.mxu0 0.0
        %344 = vmatpush.xpose.msra.mxu0 0.0
        %345 = vmatpush.xpose.msra.mxu0 0.0
        %346 = vmatpush.xpose.msra.mxu0 0.0
        %347 = vmatpush.xpose.msra.mxu0 0.0
        %348 = vmatpush.xpose.msra.mxu0 0.0
        %349 = vmatpush.xpose.msra.mxu0 0.0
        %350 = vmatpush.xpose.msra.mxu0 0.0
        %351 = vmatpush.xpose.msra.mxu0 0.0
        %352 = vmatpush.xpose.msra.mxu0 0.0
        %353 = vmatpush.xpose.msra.mxu0 %v336
        %354 = vmatmul.f32.gmra.mxu0 %v334
        %v355 = vpop.f32.mrf.mxu0
        %v356 = vadd.f32 0.0, %v355
        %357 = vdwg.mxu0
        %v358 = vsel %vm298, 1, 0
        %vm359 = vcmp.eq.s32.totalorder %v358, 1
        %v360 = vsel %vm359, %v328, -inf
        %v361 = vsel %vm359, %v356, -inf
        %v362 = vsel %vm304, %v360, -inf
        %363 = vmax.xlane.f32.xlu0 %v362
        %v364 = vpop.xlane.xlu0 %363
        %v365 = vsel %vm304, %v361, -inf
        %366 = vmax.xlane.f32.xlu0 %v365
        %v367 = vpop.xlane.xlu0 %366
        %v368 = vsub.f32 %v360, %v364
        %v369 = vsub.f32 %v361, %v367
        %v370 = vmul.f32 %v368, 1.442695
        %v371 = vpow.pop %v370
        %v372 = vmul.f32 %v369, 1.442695
        %v373 = vpow.pop %v372
        %v374 = vsel %vm304, %v371, 0.0
        %375 = vadd.xlane.f32.xlu0 %v374
        %v376 = vpop.xlane.xlu0 %375
        %v377 = vsel %vm304, %v373, 0.0
        %378 = vadd.xlane.f32.xlu0 %v377
        %v379 = vpop.xlane.xlu0 %378
        %v380 = vrcp.pop %v376
        %v381 = vmul.f32 %v376, %v380
        %v382 = vsub.f32 1.0, %v381
        %v383 = vmul.f32 %v380, %v382
        %v384 = vadd.f32 %v380, %v383
        %vm385 = vweird.f32 %v376
        %vm386 = vweird.f32 %v380
        %vm387 = vmor %vm385, %vm386
        %v388 = vsel %vm387, %v380, %v384
        %v389 = vand.u32 2147483647, %v376
        %vm390 = vcmp.eq.f32.partialorder %v389, 8.507059e+37
        %v391 = vand.u32 %v376, 2147483648
        %v392 = vor.u32 1.1754944e-38, %v391
        %v393 = vsel %vm390, %v392, %v388
        %v394 = vrcp.pop %v379
        %v395 = vmul.f32 %v379, %v394
        %v396 = vsub.f32 1.0, %v395
        %v397 = vmul.f32 %v394, %v396
        %v398 = vadd.f32 %v394, %v397
        %vm399 = vweird.f32 %v379
        %vm400 = vweird.f32 %v394
        %vm401 = vmor %vm399, %vm400
        %v402 = vsel %vm401, %v394, %v398
        %v403 = vand.u32 2147483647, %v379
        %vm404 = vcmp.eq.f32.partialorder %v403, 8.507059e+37
        %v405 = vand.u32 %v379, 2147483648
        %v406 = vor.u32 1.1754944e-38, %v405
        %v407 = vsel %vm404, %v406, %v402
        %v408 = vmul.f32 %v371, %v393
        %v409 = vmul.f32 %v373, %v407
        %410 = vrot.lane.b32.xlu0 %v289, 64
        %v411 = vpop.permute.xlu0 %410
        %v414 = vsel %vm304, %v408, 0
        %416 = vmatpush.msra.mxu0 0.0
        %417 = vmatpush.msra.mxu0 0.0
        %418 = vmatpush.msra.mxu0 0.0
        %419 = vmatpush.msra.mxu0 0.0
        %420 = vmatpush.msra.mxu0 0.0
        %421 = vmatpush.msra.mxu0 0.0
        %422 = vmatpush.msra.mxu0 0.0
        %423 = vmatpush.msra.mxu0 0.0
        %424 = vmatpush.msra.mxu0 0.0
        %425 = vmatpush.msra.mxu0 0.0
        %426 = vmatpush.msra.mxu0 0.0
        %427 = vmatpush.msra.mxu0 0.0
        %428 = vmatpush.msra.mxu0 0.0
        %429 = vmatpush.msra.mxu0 0.0
        %430 = vmatpush.msra.mxu0 0.0
        %431 = vmatpush.msra.mxu0 %v411
        %432 = vmatmul.f32.gmra.mxu0 %v414
        %v433 = vpop.f32.mrf.mxu0
        %v434 = vadd.f32 0.0, %v433
        %435 = vdwg.mxu0
        %436 = vrot.lane.b32.xlu0 %v292, 64
        %v437 = vpop.permute.xlu0 %436
        %v440 = vsel %vm304, %v409, 0
        %442 = vmatpush.msra.mxu0 0.0
        %443 = vmatpush.msra.mxu0 0.0
        %444 = vmatpush.msra.mxu0 0.0
        %445 = vmatpush.msra.mxu0 0.0
        %446 = vmatpush.msra.mxu0 0.0
        %447 = vmatpush.msra.mxu0 0.0
        %448 = vmatpush.msra.mxu0 0.0
        %449 = vmatpush.msra.mxu0 0.0
        %450 = vmatpush.msra.mxu0 0.0
        %451 = vmatpush.msra.mxu0 0.0
        %452 = vmatpush.msra.mxu0 0.0
        %453 = vmatpush.msra.mxu0 0.0
        %454 = vmatpush.msra.mxu0 0.0
        %455 = vmatpush.msra.mxu0 0.0
        %456 = vmatpush.msra.mxu0 0.0
        %457 = vmatpush.msra.mxu0 %v437
        %458 = vmatmul.f32.gmra.mxu0 %v440
        %v459 = vpop.f32.mrf.mxu0
        %v460 = vadd.f32 0.0, %v459
        %461 = vdwg.mxu0
        %462 = vst.msk [vmem:[#allocation2] sm:$0xff] %vm304, %v434
        %463 = vst.msk [vmem:[#allocation2 + $0x8] sm:$0xff] %vm304, %v460
        %464 = vrot.lane.b32.xlu0 %v299, 120
        %v465 = vpop.permute.xlu0 %464
        %466 = vrot.lane.b32.xlu0 %v289, 88
        %v467 = vpop.permute.xlu0 %466
        %v468 = vsel %vm304, %v465, 0
        %v470 = vsel %vm304, %v467, 0
        %472 = vmatpush.xpose.msra.mxu0 0.0
        %473 = vmatpush.xpose.msra.mxu0 0.0
        %474 = vmatpush.xpose.msra.mxu0 0.0
        %475 = vmatpush.xpose.msra.mxu0 0.0
        %476 = vmatpush.xpose.msra.mxu0 0.0
        %477 = vmatpush.xpose.msra.mxu0 0.0
        %478 = vmatpush.xpose.msra.mxu0 0.0
        %479 = vmatpush.xpose.msra.mxu0 0.0
        %480 = vmatpush.xpose.msra.mxu0 0.0
        %481 = vmatpush.xpose.msra.mxu0 0.0
        %482 = vmatpush.xpose.msra.mxu0 0.0
        %483 = vmatpush.xpose.msra.mxu0 0.0
        %484 = vmatpush.xpose.msra.mxu0 0.0
        %485 = vmatpush.xpose.msra.mxu0 0.0
        %486 = vmatpush.xpose.msra.mxu0 0.0
        %487 = vmatpush.xpose.msra.mxu0 %v470
        %488 = vmatmul.f32.gmra.mxu0 %v468
        %v489 = vpop.f32.mrf.mxu0
        %v490 = vadd.f32 0.0, %v489
        %491 = vdwg.mxu0
        %492 = vrot.lane.b32.xlu0 %v300, 120
        %v493 = vpop.permute.xlu0 %492
        %494 = vrot.lane.b32.xlu0 %v292, 88
        %v495 = vpop.permute.xlu0 %494
        %v496 = vsel %vm304, %v493, 0
        %v498 = vsel %vm304, %v495, 0
        %500 = vmatpush.xpose.msra.mxu0 0.0
        %501 = vmatpush.xpose.msra.mxu0 0.0
        %502 = vmatpush.xpose.msra.mxu0 0.0
        %503 = vmatpush.xpose.msra.mxu0 0.0
        %504 = vmatpush.xpose.msra.mxu0 0.0
        %505 = vmatpush.xpose.msra.mxu0 0.0
        %506 = vmatpush.xpose.msra.mxu0 0.0
        %507 = vmatpush.xpose.msra.mxu0 0.0
        %508 = vmatpush.xpose.msra.mxu0 0.0
        %509 = vmatpush.xpose.msra.mxu0 0.0
        %510 = vmatpush.xpose.msra.mxu0 0.0
        %511 = vmatpush.xpose.msra.mxu0 0.0
        %512 = vmatpush.xpose.msra.mxu0 0.0
        %513 = vmatpush.xpose.msra.mxu0 0.0
        %514 = vmatpush.xpose.msra.mxu0 0.0
        %515 = vmatpush.xpose.msra.mxu0 %v498
        %516 = vmatmul.f32.gmra.mxu0 %v496
        %v517 = vpop.f32.mrf.mxu0
        %v518 = vadd.f32 0.0, %v517
        %519 = vdwg.mxu0
        %v520 = vsel %vm359, %v490, -inf
        %v521 = vsel %vm359, %v518, -inf
        %v522 = vsel %vm304, %v520, -inf
        %523 = vmax.xlane.f32.xlu0 %v522
        %v524 = vpop.xlane.xlu0 %523
        %v525 = vsel %vm304, %v521, -inf
        %526 = vmax.xlane.f32.xlu0 %v525
        %v527 = vpop.xlane.xlu0 %526
        %v528 = vsub.f32 %v520, %v524
        %v529 = vsub.f32 %v521, %v527
        %v530 = vmul.f32 %v528, 1.442695
        %v531 = vpow.pop %v530
        %v532 = vmul.f32 %v529, 1.442695
        %v533 = vpow.pop %v532
        %v534 = vsel %vm304, %v531, 0.0
        %535 = vadd.xlane.f32.xlu0 %v534
        %v536 = vpop.xlane.xlu0 %535
        %v537 = vsel %vm304, %v533, 0.0
        %538 = vadd.xlane.f32.xlu0 %v537
        %v539 = vpop.xlane.xlu0 %538
        %v540 = vrcp.pop %v536
        %v541 = vmul.f32 %v536, %v540
        %v542 = vsub.f32 1.0, %v541
        %v543 = vmul.f32 %v540, %v542
        %v544 = vadd.f32 %v540, %v543
        %vm545 = vweird.f32 %v536
        %vm546 = vweird.f32 %v540
        %vm547 = vmor %vm545, %vm546
        %v548 = vsel %vm547, %v540, %v544
        %v549 = vand.u32 2147483647, %v536
        %vm550 = vcmp.eq.f32.partialorder %v549, 8.507059e+37
        %v551 = vand.u32 %v536, 2147483648
        %v552 = vor.u32 1.1754944e-38, %v551
        %v553 = vsel %vm550, %v552, %v548
        %v554 = vrcp.pop %v539
        %v555 = vmul.f32 %v539, %v554
        %v556 = vsub.f32 1.0, %v555
        %v557 = vmul.f32 %v554, %v556
        %v558 = vadd.f32 %v554, %v557
        %vm559 = vweird.f32 %v539
        %vm560 = vweird.f32 %v554
        %vm561 = vmor %vm559, %vm560
        %v562 = vsel %vm561, %v554, %v558
        %v563 = vand.u32 2147483647, %v539
        %vm564 = vcmp.eq.f32.partialorder %v563, 8.507059e+37
        %v565 = vand.u32 %v539, 2147483648
        %v566 = vor.u32 1.1754944e-38, %v565
        %v567 = vsel %vm564, %v566, %v562
        %v568 = vmul.f32 %v531, %v553
        %v569 = vmul.f32 %v533, %v567
        %570 = vrot.lane.b32.xlu0 %v289, 56
        %v571 = vpop.permute.xlu0 %570
        %v574 = vsel %vm304, %v568, 0
        %576 = vmatpush.msra.mxu0 0.0
        %577 = vmatpush.msra.mxu0 0.0
        %578 = vmatpush.msra.mxu0 0.0
        %579 = vmatpush.msra.mxu0 0.0
        %580 = vmatpush.msra.mxu0 0.0
        %581 = vmatpush.msra.mxu0 0.0
        %582 = vmatpush.msra.mxu0 0.0
        %583 = vmatpush.msra.mxu0 0.0
        %584 = vmatpush.msra.mxu0 0.0
        %585 = vmatpush.msra.mxu0 0.0
        %586 = vmatpush.msra.mxu0 0.0
        %587 = vmatpush.msra.mxu0 0.0
        %588 = vmatpush.msra.mxu0 0.0
        %589 = vmatpush.msra.mxu0 0.0
        %590 = vmatpush.msra.mxu0 0.0
        %591 = vmatpush.msra.mxu0 %v571
        %592 = vmatmul.f32.gmra.mxu0 %v574
        %v593 = vpop.f32.mrf.mxu0
        %v594 = vadd.f32 0.0, %v593
        %595 = vdwg.mxu0
        %596 = vrot.lane.b32.xlu0 %v292, 56
        %v597 = vpop.permute.xlu0 %596
        %v600 = vsel %vm304, %v569, 0
        %602 = vmatpush.msra.mxu0 0.0
        %603 = vmatpush.msra.mxu0 0.0
        %604 = vmatpush.msra.mxu0 0.0
        %605 = vmatpush.msra.mxu0 0.0
        %606 = vmatpush.msra.mxu0 0.0
        %607 = vmatpush.msra.mxu0 0.0
        %608 = vmatpush.msra.mxu0 0.0
        %609 = vmatpush.msra.mxu0 0.0
        %610 = vmatpush.msra.mxu0 0.0
        %611 = vmatpush.msra.mxu0 0.0
        %612 = vmatpush.msra.mxu0 0.0
        %613 = vmatpush.msra.mxu0 0.0
        %614 = vmatpush.msra.mxu0 0.0
        %615 = vmatpush.msra.mxu0 0.0
        %616 = vmatpush.msra.mxu0 0.0
        %617 = vmatpush.msra.mxu0 %v597
        %618 = vmatmul.f32.gmra.mxu0 %v600
        %v619 = vpop.f32.mrf.mxu0
        %v620 = vadd.f32 0.0, %v619
        %621 = vdwg.mxu0
        %624 = vrot.lane.b32.xlu0 %v594, 8
        %v625 = vpop.permute.xlu0 %624
        %626 = vrot.lane.b32.xlu0 %v620, 8
        %v627 = vpop.permute.xlu0 %626
        %vm630 = vcmask 130112
        %631 = vst.msk [vmem:[#allocation2] sm:$0xff] %vm630, %v625
        %632 = vst.msk [vmem:[#allocation2 + $0x8] sm:$0xff] %vm630, %v627
        %633 = vrot.lane.b32.xlu0 %v299, 112
        %v634 = vpop.permute.xlu0 %633
        %635 = vrot.lane.b32.xlu0 %v289, 80
        %v636 = vpop.permute.xlu0 %635
        %v637 = vsel %vm304, %v634, 0
        %v639 = vsel %vm304, %v636, 0
        %641 = vmatpush.xpose.msra.mxu0 0.0
        %642 = vmatpush.xpose.msra.mxu0 0.0
        %643 = vmatpush.xpose.msra.mxu0 0.0
        %644 = vmatpush.xpose.msra.mxu0 0.0
        %645 = vmatpush.xpose.msra.mxu0 0.0
        %646 = vmatpush.xpose.msra.mxu0 0.0
        %647 = vmatpush.xpose.msra.mxu0 0.0
        %648 = vmatpush.xpose.msra.mxu0 0.0
        %649 = vmatpush.xpose.msra.mxu0 0.0
        %650 = vmatpush.xpose.msra.mxu0 0.0
        %651 = vmatpush.xpose.msra.mxu0 0.0
        %652 = vmatpush.xpose.msra.mxu0 0.0
        %653 = vmatpush.xpose.msra.mxu0 0.0
        %654 = vmatpush.xpose.msra.mxu0 0.0
        %655 = vmatpush.xpose.msra.mxu0 0.0
        %656 = vmatpush.xpose.msra.mxu0 %v639
        %657 = vmatmul.f32.gmra.mxu0 %v637
        %v658 = vpop.f32.mrf.mxu0
        %v659 = vadd.f32 0.0, %v658
        %660 = vdwg.mxu0
        %661 = vrot.lane.b32.xlu0 %v300, 112
        %v662 = vpop.permute.xlu0 %661
        %663 = vrot.lane.b32.xlu0 %v292, 80
        %v664 = vpop.permute.xlu0 %663
        %v665 = vsel %vm304, %v662, 0
        %v667 = vsel %vm304, %v664, 0
        %669 = vmatpush.xpose.msra.mxu0 0.0
        %670 = vmatpush.xpose.msra.mxu0 0.0
        %671 = vmatpush.xpose.msra.mxu0 0.0
        %672 = vmatpush.xpose.msra.mxu0 0.0
        %673 = vmatpush.xpose.msra.mxu0 0.0
        %674 = vmatpush.xpose.msra.mxu0 0.0
        %675 = vmatpush.xpose.msra.mxu0 0.0
        %676 = vmatpush.xpose.msra.mxu0 0.0
        %677 = vmatpush.xpose.msra.mxu0 0.0
        %678 = vmatpush.xpose.msra.mxu0 0.0
        %679 = vmatpush.xpose.msra.mxu0 0.0
        %680 = vmatpush.xpose.msra.mxu0 0.0
        %681 = vmatpush.xpose.msra.mxu0 0.0
        %682 = vmatpush.xpose.msra.mxu0 0.0
        %683 = vmatpush.xpose.msra.mxu0 0.0
        %684 = vmatpush.xpose.msra.mxu0 %v667
        %685 = vmatmul.f32.gmra.mxu0 %v665
        %v686 = vpop.f32.mrf.mxu0
        %v687 = vadd.f32 0.0, %v686
        %688 = vdwg.mxu0
        %v689 = vsel %vm359, %v659, -inf
        %v690 = vsel %vm359, %v687, -inf
        %v691 = vsel %vm304, %v689, -inf
        %692 = vmax.xlane.f32.xlu0 %v691
        %v693 = vpop.xlane.xlu0 %692
        %v694 = vsel %vm304, %v690, -inf
        %695 = vmax.xlane.f32.xlu0 %v694
        %v696 = vpop.xlane.xlu0 %695
        %v697 = vsub.f32 %v689, %v693
        %v698 = vsub.f32 %v690, %v696
        %v699 = vmul.f32 %v697, 1.442695
        %v700 = vpow.pop %v699
        %v701 = vmul.f32 %v698, 1.442695
        %v702 = vpow.pop %v701
        %v703 = vsel %vm304, %v700, 0.0
        %704 = vadd.xlane.f32.xlu0 %v703
        %v705 = vpop.xlane.xlu0 %704
        %v706 = vsel %vm304, %v702, 0.0
        %707 = vadd.xlane.f32.xlu0 %v706
        %v708 = vpop.xlane.xlu0 %707
        %v709 = vrcp.pop %v705
        %v710 = vmul.f32 %v705, %v709
        %v711 = vsub.f32 1.0, %v710
        %v712 = vmul.f32 %v709, %v711
        %v713 = vadd.f32 %v709, %v712
        %vm714 = vweird.f32 %v705
        %vm715 = vweird.f32 %v709
        %vm716 = vmor %vm714, %vm715
        %v717 = vsel %vm716, %v709, %v713
        %v718 = vand.u32 2147483647, %v705
        %vm719 = vcmp.eq.f32.partialorder %v718, 8.507059e+37
        %v720 = vand.u32 %v705, 2147483648
        %v721 = vor.u32 1.1754944e-38, %v720
        %v722 = vsel %vm719, %v721, %v717
        %v723 = vrcp.pop %v708
        %v724 = vmul.f32 %v708, %v723
        %v725 = vsub.f32 1.0, %v724
        %v726 = vmul.f32 %v723, %v725
        %v727 = vadd.f32 %v723, %v726
        %vm728 = vweird.f32 %v708
        %vm729 = vweird.f32 %v723
        %vm730 = vmor %vm728, %vm729
        %v731 = vsel %vm730, %v723, %v727
        %v732 = vand.u32 2147483647, %v708
        %vm733 = vcmp.eq.f32.partialorder %v732, 8.507059e+37
        %v734 = vand.u32 %v708, 2147483648
        %v735 = vor.u32 1.1754944e-38, %v734
        %v736 = vsel %vm733, %v735, %v731
        %v737 = vmul.f32 %v700, %v722
        %v738 = vmul.f32 %v702, %v736
        %739 = vrot.lane.b32.xlu0 %v289, 48
        %v740 = vpop.permute.xlu0 %739
        %v743 = vsel %vm304, %v737, 0
        %745 = vmatpush.msra.mxu0 0.0
        %746 = vmatpush.msra.mxu0 0.0
        %747 = vmatpush.msra.mxu0 0.0
        %748 = vmatpush.msra.mxu0 0.0
        %749 = vmatpush.msra.mxu0 0.0
        %750 = vmatpush.msra.mxu0 0.0
        %751 = vmatpush.msra.mxu0 0.0
        %752 = vmatpush.msra.mxu0 0.0
        %753 = vmatpush.msra.mxu0 0.0
        %754 = vmatpush.msra.mxu0 0.0
        %755 = vmatpush.msra.mxu0 0.0
        %756 = vmatpush.msra.mxu0 0.0
        %757 = vmatpush.msra.mxu0 0.0
        %758 = vmatpush.msra.mxu0 0.0
        %759 = vmatpush.msra.mxu0 0.0
        %760 = vmatpush.msra.mxu0 %v740
        %761 = vmatmul.f32.gmra.mxu0 %v743
        %v762 = vpop.f32.mrf.mxu0
        %v763 = vadd.f32 0.0, %v762
        %764 = vdwg.mxu0
        %765 = vrot.lane.b32.xlu0 %v292, 48
        %v766 = vpop.permute.xlu0 %765
        %v769 = vsel %vm304, %v738, 0
        %771 = vmatpush.msra.mxu0 0.0
        %772 = vmatpush.msra.mxu0 0.0
        %773 = vmatpush.msra.mxu0 0.0
        %774 = vmatpush.msra.mxu0 0.0
        %775 = vmatpush.msra.mxu0 0.0
        %776 = vmatpush.msra.mxu0 0.0
        %777 = vmatpush.msra.mxu0 0.0
        %778 = vmatpush.msra.mxu0 0.0
        %779 = vmatpush.msra.mxu0 0.0
        %780 = vmatpush.msra.mxu0 0.0
        %781 = vmatpush.msra.mxu0 0.0
        %782 = vmatpush.msra.mxu0 0.0
        %783 = vmatpush.msra.mxu0 0.0
        %784 = vmatpush.msra.mxu0 0.0
        %785 = vmatpush.msra.mxu0 0.0
        %786 = vmatpush.msra.mxu0 %v766
        %787 = vmatmul.f32.gmra.mxu0 %v769
        %v788 = vpop.f32.mrf.mxu0
        %v789 = vadd.f32 0.0, %v788
        %790 = vdwg.mxu0
        %793 = vrot.lane.b32.xlu0 %v763, 16
        %v794 = vpop.permute.xlu0 %793
        %795 = vrot.lane.b32.xlu0 %v789, 16
        %v796 = vpop.permute.xlu0 %795
        %vm799 = vcmask 195712
        %800 = vst.msk [vmem:[#allocation2] sm:$0xff] %vm799, %v794
        %801 = vst.msk [vmem:[#allocation2 + $0x8] sm:$0xff] %vm799, %v796
        %802 = vrot.lane.b32.xlu0 %v299, 104
        %v803 = vpop.permute.xlu0 %802
        %804 = vrot.lane.b32.xlu0 %v289, 72
        %v805 = vpop.permute.xlu0 %804
        %v806 = vsel %vm304, %v803, 0
        %v808 = vsel %vm304, %v805, 0
        %810 = vmatpush.xpose.msra.mxu0 0.0
        %811 = vmatpush.xpose.msra.mxu0 0.0
        %812 = vmatpush.xpose.msra.mxu0 0.0
        %813 = vmatpush.xpose.msra.mxu0 0.0
        %814 = vmatpush.xpose.msra.mxu0 0.0
        %815 = vmatpush.xpose.msra.mxu0 0.0
        %816 = vmatpush.xpose.msra.mxu0 0.0
        %817 = vmatpush.xpose.msra.mxu0 0.0
        %818 = vmatpush.xpose.msra.mxu0 0.0
        %819 = vmatpush.xpose.msra.mxu0 0.0
        %820 = vmatpush.xpose.msra.mxu0 0.0
        %821 = vmatpush.xpose.msra.mxu0 0.0
        %822 = vmatpush.xpose.msra.mxu0 0.0
        %823 = vmatpush.xpose.msra.mxu0 0.0
        %824 = vmatpush.xpose.msra.mxu0 0.0
        %825 = vmatpush.xpose.msra.mxu0 %v808
        %826 = vmatmul.f32.gmra.mxu0 %v806
        %v827 = vpop.f32.mrf.mxu0
        %v828 = vadd.f32 0.0, %v827
        %829 = vdwg.mxu0
        %830 = vrot.lane.b32.xlu0 %v300, 104
        %v831 = vpop.permute.xlu0 %830
        %832 = vrot.lane.b32.xlu0 %v292, 72
        %v833 = vpop.permute.xlu0 %832
        %v834 = vsel %vm304, %v831, 0
        %v836 = vsel %vm304, %v833, 0
        %838 = vmatpush.xpose.msra.mxu0 0.0
        %839 = vmatpush.xpose.msra.mxu0 0.0
        %840 = vmatpush.xpose.msra.mxu0 0.0
        %841 = vmatpush.xpose.msra.mxu0 0.0
        %842 = vmatpush.xpose.msra.mxu0 0.0
        %843 = vmatpush.xpose.msra.mxu0 0.0
        %844 = vmatpush.xpose.msra.mxu0 0.0
        %845 = vmatpush.xpose.msra.mxu0 0.0
        %846 = vmatpush.xpose.msra.mxu0 0.0
        %847 = vmatpush.xpose.msra.mxu0 0.0
        %848 = vmatpush.xpose.msra.mxu0 0.0
        %849 = vmatpush.xpose.msra.mxu0 0.0
        %850 = vmatpush.xpose.msra.mxu0 0.0
        %851 = vmatpush.xpose.msra.mxu0 0.0
        %852 = vmatpush.xpose.msra.mxu0 0.0
        %853 = vmatpush.xpose.msra.mxu0 %v836
        %854 = vmatmul.f32.gmra.mxu0 %v834
        %v855 = vpop.f32.mrf.mxu0
        %v856 = vadd.f32 0.0, %v855
        %857 = vdwg.mxu0
        %v858 = vsel %vm359, %v828, -inf
        %v859 = vsel %vm359, %v856, -inf
        %v860 = vsel %vm304, %v858, -inf
        %861 = vmax.xlane.f32.xlu0 %v860
        %v862 = vpop.xlane.xlu0 %861
        %v863 = vsel %vm304, %v859, -inf
        %864 = vmax.xlane.f32.xlu0 %v863
        %v865 = vpop.xlane.xlu0 %864
        %v866 = vsub.f32 %v858, %v862
        %v867 = vsub.f32 %v859, %v865
        %v868 = vmul.f32 %v866, 1.442695
        %v869 = vpow.pop %v868
        %v870 = vmul.f32 %v867, 1.442695
        %v871 = vpow.pop %v870
        %v872 = vsel %vm304, %v869, 0.0
        %873 = vadd.xlane.f32.xlu0 %v872
        %v874 = vpop.xlane.xlu0 %873
        %v875 = vsel %vm304, %v871, 0.0
        %876 = vadd.xlane.f32.xlu0 %v875
        %v877 = vpop.xlane.xlu0 %876
        %v878 = vrcp.pop %v874
        %v879 = vmul.f32 %v874, %v878
        %v880 = vsub.f32 1.0, %v879
        %v881 = vmul.f32 %v878, %v880
        %v882 = vadd.f32 %v878, %v881
        %vm883 = vweird.f32 %v874
        %vm884 = vweird.f32 %v878
        %vm885 = vmor %vm883, %vm884
        %v886 = vsel %vm885, %v878, %v882
        %v887 = vand.u32 2147483647, %v874
        %vm888 = vcmp.eq.f32.partialorder %v887, 8.507059e+37
        %v889 = vand.u32 %v874, 2147483648
        %v890 = vor.u32 1.1754944e-38, %v889
        %v891 = vsel %vm888, %v890, %v886
        %v892 = vrcp.pop %v877
        %v893 = vmul.f32 %v877, %v892
        %v894 = vsub.f32 1.0, %v893
        %v895 = vmul.f32 %v892, %v894
        %v896 = vadd.f32 %v892, %v895
        %vm897 = vweird.f32 %v877
        %vm898 = vweird.f32 %v892
        %vm899 = vmor %vm897, %vm898
        %v900 = vsel %vm899, %v892, %v896
        %v901 = vand.u32 2147483647, %v877
        %vm902 = vcmp.eq.f32.partialorder %v901, 8.507059e+37
        %v903 = vand.u32 %v877, 2147483648
        %v904 = vor.u32 1.1754944e-38, %v903
        %v905 = vsel %vm902, %v904, %v900
        %v906 = vmul.f32 %v869, %v891
        %v907 = vmul.f32 %v871, %v905
        %908 = vrot.lane.b32.xlu0 %v289, 40
        %v909 = vpop.permute.xlu0 %908
        %v912 = vsel %vm304, %v906, 0
        %914 = vmatpush.msra.mxu0 0.0
        %915 = vmatpush.msra.mxu0 0.0
        %916 = vmatpush.msra.mxu0 0.0
        %917 = vmatpush.msra.mxu0 0.0
        %918 = vmatpush.msra.mxu0 0.0
        %919 = vmatpush.msra.mxu0 0.0
        %920 = vmatpush.msra.mxu0 0.0
        %921 = vmatpush.msra.mxu0 0.0
        %922 = vmatpush.msra.mxu0 0.0
        %923 = vmatpush.msra.mxu0 0.0
        %924 = vmatpush.msra.mxu0 0.0
        %925 = vmatpush.msra.mxu0 0.0
        %926 = vmatpush.msra.mxu0 0.0
        %927 = vmatpush.msra.mxu0 0.0
        %928 = vmatpush.msra.mxu0 0.0
        %929 = vmatpush.msra.mxu0 %v909
        %930 = vmatmul.f32.gmra.mxu0 %v912
        %v931 = vpop.f32.mrf.mxu0
        %v932 = vadd.f32 0.0, %v931
        %933 = vdwg.mxu0
        %934 = vrot.lane.b32.xlu0 %v292, 40
        %v935 = vpop.permute.xlu0 %934
        %v938 = vsel %vm304, %v907, 0
        %940 = vmatpush.msra.mxu0 0.0
        %941 = vmatpush.msra.mxu0 0.0
        %942 = vmatpush.msra.mxu0 0.0
        %943 = vmatpush.msra.mxu0 0.0
        %944 = vmatpush.msra.mxu0 0.0
        %945 = vmatpush.msra.mxu0 0.0
        %946 = vmatpush.msra.mxu0 0.0
        %947 = vmatpush.msra.mxu0 0.0
        %948 = vmatpush.msra.mxu0 0.0
        %949 = vmatpush.msra.mxu0 0.0
        %950 = vmatpush.msra.mxu0 0.0
        %951 = vmatpush.msra.mxu0 0.0
        %952 = vmatpush.msra.mxu0 0.0
        %953 = vmatpush.msra.mxu0 0.0
        %954 = vmatpush.msra.mxu0 0.0
        %955 = vmatpush.msra.mxu0 %v935
        %956 = vmatmul.f32.gmra.mxu0 %v938
        %v957 = vpop.f32.mrf.mxu0
        %v958 = vadd.f32 0.0, %v957
        %959 = vdwg.mxu0
        %962 = vrot.lane.b32.xlu0 %v932, 24
        %v963 = vpop.permute.xlu0 %962
        %964 = vrot.lane.b32.xlu0 %v958, 24
        %v965 = vpop.permute.xlu0 %964
        %vm968 = vcmask 261312
        %969 = vst.msk [vmem:[#allocation2] sm:$0xff] %vm968, %v963
        %970 = vst.msk [vmem:[#allocation2 + $0x8] sm:$0xff] %vm968, %v965
        %v971 = vld [vmem:[#allocation2] sm:$0xff]
        %v972 = vld [vmem:[#allocation2 + $0x8] sm:$0xff]
        %v974 = vperm.slane %v263, 0
        %v977 = vsel %vm264, %v971, 0
        %v980 = vsel %vm264, %v972, 0
        %982 = vmatpush.msra.mxu0 0.0
        %983 = vmatpush.msra.mxu0 0.0
        %984 = vmatpush.msra.mxu0 0.0
        %985 = vmatpush.msra.mxu0 0.0
        %986 = vmatpush.msra.mxu0 0.0
        %987 = vmatpush.msra.mxu0 0.0
        %988 = vmatpush.msra.mxu0 0.0
        %989 = vmatpush.msra.mxu0 0.0
        %990 = vmatpush.msra.mxu0 0.0
        %991 = vmatpush.msra.mxu0 0.0
        %992 = vmatpush.msra.mxu0 0.0
        %993 = vmatpush.msra.mxu0 0.0
        %994 = vmatpush.msra.mxu0 %v262
        %995 = vmatpush.msra.mxu0 %v261
        %996 = vmatpush.msra.mxu0 %v260
        %997 = vmatpush.msra.mxu0 %v259
        %998 = vmatmul.f32.gmra.mxu0 %v977
        %v999 = vpop.f32.mrf.mxu0
        %v1000 = vadd.f32 %v974, %v999
        %1001 = vmatmul.f32.gmra.mxu0 %v980
        %v1002 = vpop.f32.mrf.mxu0
        %v1003 = vadd.f32 %v974, %v1002
        %1004 = vdwg.mxu0
        %1005 = vst.msk [vmem:[%s250] sm:$0xff] %vm264, %v1000
        %1006 = vst.msk [vmem:[%s250 + $0x8] sm:$0xff] %vm264, %v1003
        %s1007 = sand.u32 %s119, 1
        %s1008 = scalar_lea.sflag [#allocation5], %s1007
        %s1009 = sand.u32 %s119, 1
        %s1010 = smul.addr %s1009, 16
        %s1011 = scalar_lea.vmem [#allocation9], %s1010
        // Predicated region
        $region49: #{tpu_custom_call.1} parent=35 // pred_check
          %p1012 = pneg %p129
        $region50: #{tpu_custom_call.1} parent=35 // pred_check_branch
          %1014 = sbr.rel (%p1012) target = $region52
        $region51: #{tpu_custom_call.1} parent=35 // pred_region
          %s1015 = smul.u32 2, %s22
          %1017 = vsyncadd %s1008, 0
          %s1018 = smul.addr %s1015, 8
          %s1019 = scalar_lea.hbm %s4, %s1018
          %s1020 = sshll.u32 %s1011, 4
          %s1021 = int_to_ptr.vmem [resolvable:$true] %s1020
          %s1022 = sshll.u32 %s1019, 4
          %s1023 = int_to_ptr.hbm [resolvable:$true] %s1022
          %1028 = dma.vmem_to_hbm [thread:$0]  %s1021, 256, %s1023, %s1008, 128, 128, 8
        $region52: #{tpu_custom_call.1} parent=35 // pred_fallthru
          _
      $region36: #{tpu_custom_call.1} parent=5 // pred_fallthru
        _
      %p1029 = scmp.le.s32.totalorder 2, %s17
      // Predicated region
      $region53: #{tpu_custom_call.1} parent=5 // pred_check
        %p1030 = pneg %p1029
      $region54: #{tpu_custom_call.1} parent=5 // pred_check_branch
        %1032 = sbr.rel (%p1030) target = $region56
      $region55: #{tpu_custom_call.1} parent=5 // pred_region
        %s1033 = ssub.s32 %s17, 2
        // Predicated region
        $region57: #{tpu_custom_call.1} parent=55 // pred_check
          %p1034 = pneg %p135
        $region58: #{tpu_custom_call.1} parent=55 // pred_check_branch
          %1036 = sbr.rel (%p1034) target = $region60
        $region59: #{tpu_custom_call.1} parent=55 // pred_region
          %s1037 = sand.u32 %s120, 1
          %s1038 = scalar_lea.sflag [#allocation5], %s1037
          %s1039 = sand.u32 %s120, 1
          %s1040 = smul.addr %s1039, 16
          %s1041 = scalar_lea.vmem [#allocation9], %s1040
          %1043 = dma.done %s1038, 256
        $region60: #{tpu_custom_call.1} parent=55 // pred_fallthru
          _
      $region56: #{tpu_custom_call.1} parent=5 // pred_fallthru
        _
    $region6: #{tpu_custom_call.1} parent=1 // loop_footer
      %s21 = sadd.s32 1, %s17
    $region7: #{tpu_custom_call.1} parent=1 // loop_footer_branch
      %16 = sbr.rel target = $region3
    $region8: #{tpu_custom_call.1} parent=1 // loop_exit
      _
    %1044 = vsyncpa [#allocation4], 1
    %s1045 = scalar_lea.sflag [#allocation4], 1
    %1046 = vsyncpa %s1045, 1
    %1047 = vsyncpa [#allocation7], 1
    %1048 = vsyncpa [#allocation5], 1
    %s1049 = scalar_lea.sflag [#allocation5], 1
    %1050 = vsyncpa %s1049, 1

</llo_original>
